<compile_context>
chip_gen: v6e
topology: v6e:2x2x1
jax: 0.10.0
libtpu: 0.0.40
codegen_flags: <defaults>
</compile_context>

<pallas_src>
import jax
import jax.numpy as jnp
from jax.experimental import pallas as pl
from jax.experimental.pallas import tpu as pltpu


def _round_up(x, m):
    return (x + m - 1) // m * m


# ---------------------------------------------------------------------------
# Fused Pallas kernel
# ---------------------------------------------------------------------------
def _make_channel_attention_kernel(ts: int, hw: int):
    """Kernel over grid (batch, spatial_tiles).

    refs: x (1, TS, C) bf16, w1 (C, Cr) bf16, w2 (Cr, C) bf16,
          out (1, 1, C) f32, scratch sum/max (1, C) f32.
    """
    inv_hw = 1.0 / float(hw)
    needs_mask = (hw % ts) != 0  # spatial axis was zero-padded

    def kernel(x_ref, w1_ref, w2_ref, o_ref, sum_ref, max_ref):
        s = pl.program_id(1)

        @pl.when(s == 0)
        def _init():
            sum_ref[...] = jnp.zeros_like(sum_ref)
            max_ref[...] = jnp.full_like(max_ref, -jnp.inf)

        xb = x_ref[0].astype(jnp.float32)                    # (TS, C)

        # avg-pool accumulation (zero padding is neutral for the sum)
        sum_ref[...] += jnp.sum(xb, axis=0, keepdims=True)

        # max-pool accumulation (mask padded rows with -inf if any)
        if needs_mask:
            row = jax.lax.broadcasted_iota(jnp.int32, xb.shape, 0) + s * ts
            xm = jnp.where(row < hw, xb, -jnp.inf)
        else:
            xm = xb
        max_ref[...] = jnp.maximum(
            max_ref[...], jnp.max(xm, axis=0, keepdims=True))

        @pl.when(s == pl.num_programs(1) - 1)
        def _finalize():
            avg = (sum_ref[...] * inv_hw).astype(jnp.bfloat16)   # (1, C)
            mx = max_ref[...].astype(jnp.bfloat16)               # (1, C)
            # fc1 + ReLU on both pooled vectors (bf16 MXU, f32 accumulate)
            h = (jnp.maximum(jnp.dot(avg, w1_ref[...],
                                     preferred_element_type=jnp.float32), 0.0)
                 + jnp.maximum(jnp.dot(mx, w1_ref[...],
                                       preferred_element_type=jnp.float32), 0.0))
            # fc2 is linear & bias-free -> fc2(ha)+fc2(hm) == fc2(ha+hm)
            z = jnp.dot(h.astype(jnp.bfloat16), w2_ref[...],
                        preferred_element_type=jnp.float32)      # (1, C)
            o_ref[0] = jax.nn.sigmoid(z)

    return kernel


def channel_attention(x_nchw, w1, w2, *, ts_max=1024):
    """ChannelAttention forward.

    x_nchw: (N, C, H, W) float32
    w1:     (C, C//ratio)  -- fc1 1x1 conv as a matmul (Cin, Cout)
    w2:     (C//ratio, C)  -- fc2 1x1 conv as a matmul (Cin, Cout)
    returns (N, C, 1, 1) float32 attention weights in (0, 1)
    """
    N, C, H, W = x_nchw.shape
    Cr = w1.shape[1]
    HW = H * W

    # NCHW -> (N, H*W, C): channels on the lane axis, spatial on sublanes.
    x = jnp.transpose(x_nchw, (0, 2, 3, 1)).reshape(N, HW, C)
    x = x.astype(jnp.bfloat16)                    # halve the HBM read of x

    # Spatial tile: multiple of 16 (bf16 sublane packing), capped for VMEM.
    ts = min(_round_up(HW, 16), ts_max)
    hwp = _round_up(HW, ts)
    if hwp != HW:
        x = jnp.pad(x, ((0, 0), (0, hwp - HW), (0, 0)))

    w1b = w1.astype(jnp.bfloat16)
    w2b = w2.astype(jnp.bfloat16)

    grid = (N, hwp // ts)
    kernel = _make_channel_attention_kernel(ts, HW)

    out = pl.pallas_call(
        kernel,
        out_shape=jax.ShapeDtypeStruct((N, 1, C), jnp.float32),
        grid=grid,
        in_specs=[
            pl.BlockSpec((1, ts, C), lambda n, s: (n, s, 0)),   # x tile
            pl.BlockSpec((C, Cr), lambda n, s: (0, 0)),         # fc1 weights
            pl.BlockSpec((Cr, C), lambda n, s: (0, 0)),         # fc2 weights
        ],
        out_specs=pl.BlockSpec((1, 1, C), lambda n, s: (n, 0, 0)),
        scratch_shapes=[
            pltpu.VMEM((1, C), jnp.float32),   # running sum  (avg pool)
            pltpu.VMEM((1, C), jnp.float32),   # running max  (max pool)
        ],
        compiler_params=pltpu.CompilerParams(
            dimension_semantics=("parallel", "arbitrary"),
            vmem_limit_bytes=32 * 1024 * 1024,
        ),
    )(x, w1b, w2b)

    return out.reshape(N, C, 1, 1)


# ---------------------------------------------------------------------------
# Pure-JAX f32 reference (for a correctness sanity check)
# ---------------------------------------------------------------------------
def channel_attention_ref(x, w1, w2):
    avg = jnp.mean(x, axis=(2, 3))                       # (N, C)
    mx = jnp.max(x, axis=(2, 3))                         # (N, C)

    def mlp(p):
        return jnp.maximum(p @ w1, 0.0) @ w2

    z = mlp(avg) + mlp(mx)
    return jax.nn.sigmoid(z)[:, :, None, None]


if __name__ == "__main__":
    key = jax.random.PRNGKey(0)
    kx, k1, k2 = jax.random.split(key, 3)

    # Module defaults: in_planes=256, ratio hard-coded as //16 in the spec.
    N, C, H, W = 2, 256, 16, 16
    Cr = C // 16

    x = jax.random.normal(kx, (N, C, H, W), jnp.float32)
    w1 = jax.random.normal(k1, (C, Cr), jnp.float32) * (2.0 / C) ** 0.5
    w2 = jax.random.normal(k2, (Cr, C), jnp.float32) * (2.0 / Cr) ** 0.5

    out = channel_attention(x, w1, w2)
    out = jax.block_until_ready(out)

    assert out.shape == (N, C, 1, 1), out.shape
    assert bool(jnp.all(jnp.isfinite(out)))

    ref = channel_attention_ref(x, w1, w2)
    err = float(jnp.max(jnp.abs(out - ref)))
    assert err < 5e-2, f"max abs err vs f32 reference: {err}"

    print("KERNEL_OK")
</pallas_src>

<mosaic_0001>
module attributes {stable_mosaic.version = 11 : i64} {
  func.func @kernel(%arg0: i32, %arg1: i32, %arg2: memref<1x256x256xbf16, #tpu.memory_space<vmem>>, %arg3: memref<256x16xbf16, #tpu.memory_space<vmem>>, %arg4: memref<16x256xbf16, #tpu.memory_space<vmem>>, %arg5: memref<1x1x256xf32, #tpu.memory_space<vmem>>, %arg6: memref<1x256xf32, #tpu.memory_space<vmem>>, %arg7: memref<1x256xf32, #tpu.memory_space<vmem>>) attributes {dimension_semantics = [#tpu.dimension_semantics<parallel>, #tpu.dimension_semantics<arbitrary>], iteration_bounds = array<i64: 2, 1>, scalar_prefetch = 0 : i64, scratch_operands = 2 : i64, tpu.core_type = #tpu.core_type<tc>, window_params = [{transform_indices = @transform_0, window_bounds = array<i64: 1, 256, 256>}, {pipeline_mode = #tpu.pipeline_mode<synchronous>, transform_indices = @transform_1, window_bounds = array<i64: 256, 16>}, {pipeline_mode = #tpu.pipeline_mode<synchronous>, transform_indices = @transform_2, window_bounds = array<i64: 16, 256>}, {transform_indices = @transform_3, window_bounds = array<i64: 1, 1, 256>}]} {
    %c0_i32 = arith.constant 0 : i32
    %0 = arith.cmpi eq, %arg1, %c0_i32 : i32
    %1 = arith.extui %0 : i1 to i32
    %c0_i32_0 = arith.constant 0 : i32
    %2 = arith.cmpi ne, %1, %c0_i32_0 : i32
    scf.if %2 {
      %cst_14 = arith.constant 0.000000e+00 : f32
      %19 = vector.broadcast %cst_14 : f32 to vector<1x256xf32>
      %c0_15 = arith.constant 0 : index
      %c0_16 = arith.constant 0 : index
      %20 = vector.load %arg6[%c0_15, %c0_16] : memref<1x256xf32, #tpu.memory_space<vmem>>, vector<1x256xf32>
      tpu.vector_store %arg6[%c0_15, %c0_16], %19 {strides = array<i32>} : memref<1x256xf32, #tpu.memory_space<vmem>>, vector<1x256xf32>,
      %cst_17 = arith.constant 0xFF800000 : f32
      %21 = vector.broadcast %cst_17 : f32 to vector<1x256xf32>
      %c0_18 = arith.constant 0 : index
      %c0_19 = arith.constant 0 : index
      %22 = vector.load %arg7[%c0_18, %c0_19] : memref<1x256xf32, #tpu.memory_space<vmem>>, vector<1x256xf32>
      tpu.vector_store %arg7[%c0_18, %c0_19], %21 {strides = array<i32>} : memref<1x256xf32, #tpu.memory_space<vmem>>, vector<1x256xf32>,
    } else {
    }
    %c0 = arith.constant 0 : index
    %c0_1 = arith.constant 0 : index
    %c0_2 = arith.constant 0 : index
    %3 = vector.load %arg2[%c0, %c0_1, %c0_2] : memref<1x256x256xbf16, #tpu.memory_space<vmem>>, vector<1x256x256xbf16>
    %4 = vector.shape_cast %3 : vector<1x256x256xbf16> to vector<256x256xbf16>
    %5 = arith.extf %4 : vector<256x256xbf16> to vector<256x256xf32>
    %c0_3 = arith.constant 0 : index
    %c0_4 = arith.constant 0 : index
    %6 = vector.load %arg6[%c0_3, %c0_4] : memref<1x256xf32, #tpu.memory_space<vmem>>, vector<1x256xf32>
    %cst = arith.constant dense<0.000000e+00> : vector<256xf32>
    %7 = vector.multi_reduction <add>, %5, %cst [0] : vector<256x256xf32> to vector<256xf32>
    %8 = vector.shape_cast %7 : vector<256xf32> to vector<1x256xf32>
    %9 = arith.addf %6, %8 : vector<1x256xf32>
    %c0_5 = arith.constant 0 : index
    %c0_6 = arith.constant 0 : index
    %10 = vector.load %arg6[%c0_5, %c0_6] : memref<1x256xf32, #tpu.memory_space<vmem>>, vector<1x256xf32>
    tpu.vector_store %arg6[%c0_5, %c0_6], %9 {strides = array<i32>} : memref<1x256xf32, #tpu.memory_space<vmem>>, vector<1x256xf32>,
    %c0_7 = arith.constant 0 : index
    %c0_8 = arith.constant 0 : index
    %11 = vector.load %arg7[%c0_7, %c0_8] : memref<1x256xf32, #tpu.memory_space<vmem>>, vector<1x256xf32>
    %cst_9 = arith.constant dense<0xFF800000> : vector<256xf32>
    %12 = vector.multi_reduction <maximumf>, %5, %cst_9 [0] : vector<256x256xf32> to vector<256xf32>
    %13 = vector.shape_cast %12 : vector<256xf32> to vector<1x256xf32>
    %14 = arith.maximumf %11, %13 : vector<1x256xf32>
    %c0_10 = arith.constant 0 : index
    %c0_11 = arith.constant 0 : index
    %15 = vector.load %arg7[%c0_10, %c0_11] : memref<1x256xf32, #tpu.memory_space<vmem>>, vector<1x256xf32>
    tpu.vector_store %arg7[%c0_10, %c0_11], %14 {strides = array<i32>} : memref<1x256xf32, #tpu.memory_space<vmem>>, vector<1x256xf32>,
    %c0_i32_12 = arith.constant 0 : i32
    %16 = arith.cmpi eq, %arg1, %c0_i32_12 : i32
    %17 = arith.extui %16 : i1 to i32
    %c0_i32_13 = arith.constant 0 : i32
    %18 = arith.cmpi ne, %17, %c0_i32_13 : i32
    scf.if %18 {
      %c0_14 = arith.constant 0 : index
      %c0_15 = arith.constant 0 : index
      %19 = vector.load %arg6[%c0_14, %c0_15] : memref<1x256xf32, #tpu.memory_space<vmem>>, vector<1x256xf32>
      %cst_16 = arith.constant 3.906250e-03 : f32
      %20 = vector.broadcast %cst_16 : f32 to vector<1x256xf32>
      %21 = arith.mulf %19, %20 : vector<1x256xf32>
      %22 = arith.truncf %21 : vector<1x256xf32> to vector<1x256xbf16>
      %c0_17 = arith.constant 0 : index
      %c0_18 = arith.constant 0 : index
      %23 = vector.load %arg7[%c0_17, %c0_18] : memref<1x256xf32, #tpu.memory_space<vmem>>, vector<1x256xf32>
      %24 = arith.truncf %23 : vector<1x256xf32> to vector<1x256xbf16>
      %c0_19 = arith.constant 0 : index
      %c0_20 = arith.constant 0 : index
      %25 = vector.load %arg3[%c0_19, %c0_20] : memref<256x16xbf16, #tpu.memory_space<vmem>>, vector<256x16xbf16>
      %cst_21 = arith.constant dense<0.000000e+00> : vector<1x16xf32>
      %26 = tpu.matmul %22, %25, %cst_21 {dimension_numbers = #tpu.dot_dimension_numbers<[1], [0], [0], [1], [0, 0, 1, 1], [], []>} : vector<1x256xbf16>, vector<256x16xbf16>, vector<1x16xf32> -> vector<1x16xf32>
      %cst_22 = arith.constant 0.000000e+00 : f32
      %27 = vector.broadcast %cst_22 : f32 to vector<1x16xf32>
      %28 = arith.maximumf %26, %27 : vector<1x16xf32>
      %c0_23 = arith.constant 0 : index
      %c0_24 = arith.constant 0 : index
      %29 = vector.load %arg3[%c0_23, %c0_24] : memref<256x16xbf16, #tpu.memory_space<vmem>>, vector<256x16xbf16>
      %cst_25 = arith.constant dense<0.000000e+00> : vector<1x16xf32>
      %30 = tpu.matmul %24, %29, %cst_25 {dimension_numbers = #tpu.dot_dimension_numbers<[1], [0], [0], [1], [0, 0, 1, 1], [], []>} : vector<1x256xbf16>, vector<256x16xbf16>, vector<1x16xf32> -> vector<1x16xf32>
      %cst_26 = arith.constant 0.000000e+00 : f32
      %31 = vector.broadcast %cst_26 : f32 to vector<1x16xf32>
      %32 = arith.maximumf %30, %31 : vector<1x16xf32>
      %33 = arith.addf %28, %32 : vector<1x16xf32>
      %34 = arith.truncf %33 : vector<1x16xf32> to vector<1x16xbf16>
      %c0_27 = arith.constant 0 : index
      %c0_28 = arith.constant 0 : index
      %35 = vector.load %arg4[%c0_27, %c0_28] : memref<16x256xbf16, #tpu.memory_space<vmem>>, vector<16x256xbf16>
      %cst_29 = arith.constant dense<0.000000e+00> : vector<1x256xf32>
      %36 = tpu.matmul %34, %35, %cst_29 {dimension_numbers = #tpu.dot_dimension_numbers<[1], [0], [0], [1], [0, 0, 1, 1], [], []>} : vector<1x16xbf16>, vector<16x256xbf16>, vector<1x256xf32> -> vector<1x256xf32>
      %37 = arith.negf %36 : vector<1x256xf32>
      %38 = math.exp %37 : vector<1x256xf32>
      %cst_30 = arith.constant 1.000000e+00 : f32
      %39 = vector.broadcast %cst_30 : f32 to vector<1x256xf32>
      %40 = arith.addf %39, %38 : vector<1x256xf32>
      %41 = arith.divf %39, %40 : vector<1x256xf32>
      %c0_31 = arith.constant 0 : index
      %c0_32 = arith.constant 0 : index
      %c0_33 = arith.constant 0 : index
      %42 = vector.load %arg5[%c0_31, %c0_32, %c0_33] : memref<1x1x256xf32, #tpu.memory_space<vmem>>, vector<1x1x256xf32>
      %43 = vector.shape_cast %42 : vector<1x1x256xf32> to vector<1x256xf32>
      %44 = vector.shape_cast %41 : vector<1x256xf32> to vector<1x1x256xf32>
      tpu.vector_store %arg5[%c0_31, %c0_32, %c0_33], %44 {strides = array<i32>} : memref<1x1x256xf32, #tpu.memory_space<vmem>>, vector<1x1x256xf32>,
    } else {
    }
    return
  }
  func.func @transform_0(%arg0: i32, %arg1: i32) -> (i32, i32, i32) {
    %c0_i32 = arith.constant 0 : i32
    %c0_i32_0 = arith.constant 0 : i32
    return %arg0, %arg1, %c0_i32 : i32, i32, i32
  }
  func.func @transform_1(%arg0: i32, %arg1: i32) -> (i32, i32) {
    %c0_i32 = arith.constant 0 : i32
    %c0_i32_0 = arith.constant 0 : i32
    %c0_i32_1 = arith.constant 0 : i32
    return %c0_i32, %c0_i32_0 : i32, i32
  }
  func.func @transform_2(%arg0: i32, %arg1: i32) -> (i32, i32) {
    %c0_i32 = arith.constant 0 : i32
    %c0_i32_0 = arith.constant 0 : i32
    %c0_i32_1 = arith.constant 0 : i32
    return %c0_i32, %c0_i32_0 : i32, i32
  }
  func.func @transform_3(%arg0: i32, %arg1: i32) -> (i32, i32, i32) {
    %c0_i32 = arith.constant 0 : i32
    %c0_i32_0 = arith.constant 0 : i32
    %c0_i32_1 = arith.constant 0 : i32
    return %arg0, %c0_i32, %c0_i32_0 : i32, i32, i32
  }
}

</mosaic_0001>

<llo_original>
// kernel: tpu_custom_call.1
$region0: #{tpu_custom_call.1}
  #allocation0 [shape = 'u32[]', space=smem, size = 0x4, offset = 0x4, fixed_abs, tag = 'smem constant byte address 0x4 - core index']
  #allocation1 [shape = 'u32[144,128]{1,0:T(1,128)}', space=vmem, size = 0x12000, scoped, tag = 'internal scratch']
  #allocation2 [shape = 'f32[1,256]{1,0:T(1,128)}', space=vmem, size = 0x400, scoped, tag = 'scratch operand']
  #allocation3 [shape = 'f32[1,256]{1,0:T(1,128)}', space=vmem, size = 0x400, scoped, tag = 'scratch operand']
  %s0 = inlined_call_operand.hbm [shape: bf16[2,256,256], index: 0, kind: input, shape index: {}]
  %s1 = inlined_call_operand.vmem [shape: bf16[256,16], index: 1, kind: input, shape index: {}]
  %s2 = inlined_call_operand.vmem [shape: bf16[16,256], index: 2, kind: input, shape index: {}]
  %s3 = inlined_call_operand.hbm [shape: f32[2,1,256], index: 3, kind: output, shape index: {}]
  %s4 = sld [smem:[#allocation0]]
  $region57: #{tpu_custom_call.1} parent=0
    _
  %s6 = ssub.s32 1, %s4
  %s7 = scalar_select 0, %s6, %s4
  $region1: #{tpu_custom_call.1} parent=0
    #allocation4 [shape = 'u8[262144]{0}', space=vmem, size = 0x40000, scoped, tag = 'input window, operand 0']
    #allocation5 [shape = 's32[2]{0}', space=sflag, size = 0x8, scoped, tag = 'scoped memory for tpu_custom_call.1']
    #allocation6 [shape = 's32[2]{0}', space=sflag, size = 0x8, scoped, tag = 'scoped memory for tpu_custom_call.1']
    #allocation7 [shape = 'u8[2048]{0}', space=vmem, size = 0x800, scoped, tag = 'output window, operand 0']
    %8 = vsyncpa [#allocation5], 0
    %s9 = scalar_lea.sflag [#allocation5], 1
    %10 = vsyncpa %s9, 0
    %11 = vsyncpa [#allocation6], 0
    %s12 = scalar_lea.sflag [#allocation6], 1
    %13 = vsyncpa %s12, 0
    loop: start=0, step=1, limit=4
    $region2: #{tpu_custom_call.1} parent=1 // loop_pre_header
      _
    $region3: #{tpu_custom_call.1} parent=1 // loop_header
      %s15 = sphi 0, %s19
      %p16 = scmp.ge.s32.totalorder %s15, 4
      %s22 = sphi 0, %s34
      %s23 = sphi 0, %s30
      %s24 = sphi 0, %s22
      %s25 = sphi 0, %s23
      %s26 = sphi 0, %s24
      %s27 = sphi 0, %s25
      %s39 = sphi 0, %s41
      %s42 = sphi 0, %s39
      %s43 = sphi 0, %s42
      %s59 = sphi 0, %s43
      %s63 = sphi 0, %s63
      %s65 = sphi 0, %s63
      %s66 = sphi 0, %s65
      %s80 = sphi 0, %s66
      %s84 = sphi 0, %s84
      %s86 = sphi 0, %s84
      %s87 = sphi 0, %s86
      %s101 = sphi 0, %s87
      %s107 = sphi 0, %s109
      %s110 = sphi 0, %s107
      %s111 = sphi 0, %s110
      %s127 = sphi 0, %s111
    $region4: #{tpu_custom_call.1} parent=1 // loop_header_branch
      %18 = sbr.rel (%p16) target = $region8
    $region5: #{tpu_custom_call.1} parent=1 // loop_body
      %s20 = ssub.s32 %s15, 1
      %s21 = ssub.s32 %s15, 2
      %s28 = sadd.s32 1, %s23
      %p29 = scmp.ge.s32.totalorder %s28, 1
      %s30 = scalar_select %p29, 0, %s28
      %s31 = sadd.s32 1, %s22
      %s32 = scalar_select %p29, %s31, %s22
      %p33 = scmp.ge.s32.totalorder %s32, 2
      %s34 = scalar_select %p33, 0, %s32
      %s35 = ssub.s32 %s22, %s34
      %s36 = ssub.s32 %s23, %s30
      %s37 = sor.u32 %s35, %s36
      %p38 = scmp.eq.s32.totalorder %s37, 0
      %s40 = sadd.s32 %s39, 1
      %s41 = scalar_select %p38, %s39, %s40
      %p44 = pneg %p38
      %p45 = scmp.eq.s32.totalorder %s15, 1
      %p46 = por %p44, %p45
      %p47 = scmp.ne.s32.totalorder %s39, %s42
      %p48 = scmp.eq.s32.totalorder %s15, 0
      %p49 = por %p47, %p48
      %p50 = scmp.ne.s32.totalorder %s39, %s42
      %p51 = scmp.eq.s32.totalorder %s20, 1
      %p52 = por %p50, %p51
      %p53 = scmp.ne.s32.totalorder %s42, %s43
      %p54 = scmp.eq.s32.totalorder %s20, 0
      %p55 = por %p53, %p54
      %p56 = scmp.ne.s32.totalorder %s42, %s43
      %p57 = scmp.eq.s32.totalorder %s21, 1
      %p58 = por %p56, %p57
      %p60 = scmp.ne.s32.totalorder %s43, %s59
      %p61 = scmp.eq.s32.totalorder %s21, 0
      %p62 = por %p60, %p61
      %s64 = sadd.s32 %s63, 1
      %p67 = scmp.eq.s32.totalorder %s15, 1
      %p68 = scmp.ne.s32.totalorder %s63, %s65
      %p69 = scmp.eq.s32.totalorder %s15, 0
      %p70 = por %p68, %p69
      %p71 = scmp.ne.s32.totalorder %s63, %s65
      %p72 = scmp.eq.s32.totalorder %s20, 1
      %p73 = por %p71, %p72
      %p74 = scmp.ne.s32.totalorder %s65, %s66
      %p75 = scmp.eq.s32.totalorder %s20, 0
      %p76 = por %p74, %p75
      %p77 = scmp.ne.s32.totalorder %s65, %s66
      %p78 = scmp.eq.s32.totalorder %s21, 1
      %p79 = por %p77, %p78
      %p81 = scmp.ne.s32.totalorder %s66, %s80
      %p82 = scmp.eq.s32.totalorder %s21, 0
      %p83 = por %p81, %p82
      %s85 = sadd.s32 %s84, 1
      %p88 = scmp.eq.s32.totalorder %s15, 1
      %p89 = scmp.ne.s32.totalorder %s84, %s86
      %p90 = scmp.eq.s32.totalorder %s15, 0
      %p91 = por %p89, %p90
      %p92 = scmp.ne.s32.totalorder %s84, %s86
      %p93 = scmp.eq.s32.totalorder %s20, 1
      %p94 = por %p92, %p93
      %p95 = scmp.ne.s32.totalorder %s86, %s87
      %p96 = scmp.eq.s32.totalorder %s20, 0
      %p97 = por %p95, %p96
      %p98 = scmp.ne.s32.totalorder %s86, %s87
      %p99 = scmp.eq.s32.totalorder %s21, 1
      %p100 = por %p98, %p99
      %p102 = scmp.ne.s32.totalorder %s87, %s101
      %p103 = scmp.eq.s32.totalorder %s21, 0
      %p104 = por %p102, %p103
      %s105 = ssub.s32 %s22, %s34
      %p106 = scmp.eq.s32.totalorder %s105, 0
      %s108 = sadd.s32 %s107, 1
      %s109 = scalar_select %p106, %s107, %s108
      %p112 = pneg %p106
      %p113 = scmp.eq.s32.totalorder %s15, 1
      %p114 = por %p112, %p113
      %p115 = scmp.ne.s32.totalorder %s107, %s110
      %p116 = scmp.eq.s32.totalorder %s15, 0
      %p117 = por %p115, %p116
      %p118 = scmp.ne.s32.totalorder %s107, %s110
      %p119 = scmp.eq.s32.totalorder %s20, 1
      %p120 = por %p118, %p119
      %p121 = scmp.ne.s32.totalorder %s110, %s111
      %p122 = scmp.eq.s32.totalorder %s20, 0
      %p123 = por %p121, %p122
      %p124 = scmp.ne.s32.totalorder %s110, %s111
      %p125 = scmp.eq.s32.totalorder %s21, 1
      %p126 = por %p124, %p125
      %p128 = scmp.ne.s32.totalorder %s111, %s127
      %p129 = scmp.eq.s32.totalorder %s21, 0
      %p130 = por %p128, %p129
      %p131 = scmp.le.s32.totalorder 1, %s15
      %p132 = scmp.lt.s32.totalorder %s15, 3
      %p133 = pnand %p131, %p132
      %p134 = pneg %p133
      // Predicated region
      $region9: #{tpu_custom_call.1} parent=5 // pred_check
        _
      $region10: #{tpu_custom_call.1} parent=5 // pred_check_branch
        %136 = sbr.rel (%p133) target = $region12
      $region11: #{tpu_custom_call.1} parent=5 // pred_region
        %s137 = ssub.s32 %s15, 1
        // Predicated region
        $region13: #{tpu_custom_call.1} parent=11 // pred_check
          %p138 = pneg %p76
        $region14: #{tpu_custom_call.1} parent=11 // pred_check_branch
          %140 = sbr.rel (%p138) target = $region16
        $region15: #{tpu_custom_call.1} parent=11 // pred_region
          _
        $region16: #{tpu_custom_call.1} parent=11 // pred_fallthru
          _
        // Predicated region
        $region17: #{tpu_custom_call.1} parent=11 // pred_check
          %p141 = pneg %p97
        $region18: #{tpu_custom_call.1} parent=11 // pred_check_branch
          %143 = sbr.rel (%p141) target = $region20
        $region19: #{tpu_custom_call.1} parent=11 // pred_region
          _
        $region20: #{tpu_custom_call.1} parent=11 // pred_fallthru
          _
      $region12: #{tpu_custom_call.1} parent=5 // pred_fallthru
        _
      %p144 = scmp.lt.s32.totalorder %s15, 2
      // Predicated region
      $region21: #{tpu_custom_call.1} parent=5 // pred_check
        %p145 = pneg %p144
      $region22: #{tpu_custom_call.1} parent=5 // pred_check_branch
        %147 = sbr.rel (%p145) target = $region24
      $region23: #{tpu_custom_call.1} parent=5 // pred_region
        // Predicated region
        $region25: #{tpu_custom_call.1} parent=23 // pred_check
          %p148 = pneg %p49
        $region26: #{tpu_custom_call.1} parent=23 // pred_check_branch
          %150 = sbr.rel (%p148) target = $region28
        $region27: #{tpu_custom_call.1} parent=23 // pred_region
          %s151 = sand.u32 %s39, 1
          %s152 = scalar_lea.sflag [#allocation5], %s151
          %s153 = sand.u32 %s39, 1
          %s154 = smul.addr %s153, 256
          %s155 = scalar_lea.vmem [#allocation4], %s154
          %s156 = smul.u32 32, %s23
          %s158 = ssub.s32 4096, 4096
          %159 = vsyncadd %s152, %s158
          %s160 = smul.addr %s156, 2
          %s161 = smul.addr %s22, 64
          %s162 = sadd.s32 %s160, %s161
          %s163 = smul.addr %s162, 64
          %s164 = scalar_lea.hbm %s0, %s163
          %s165 = sshll.u32 %s155, 4
          %s166 = int_to_ptr.vmem [resolvable:$true] %s165
          %171 = dma.hbm_to_vmem [thread:$0]  %s164, 4096, %s166, %s152, 128, 128, 8
        $region28: #{tpu_custom_call.1} parent=23 // pred_fallthru
          _
      $region24: #{tpu_custom_call.1} parent=5 // pred_fallthru
        _
      %p172 = scmp.le.s32.totalorder 1, %s15
      %p173 = scmp.lt.s32.totalorder %s15, 3
      %p174 = pnand %p172, %p173
      %p175 = pneg %p174
      // Predicated region
      $region29: #{tpu_custom_call.1} parent=5 // pred_check
        _
      $region30: #{tpu_custom_call.1} parent=5 // pred_check_branch
        %177 = sbr.rel (%p174) target = $region32
      $region31: #{tpu_custom_call.1} parent=5 // pred_region
        %s178 = ssub.s32 %s15, 1
        %s179 = sand.u32 %s42, 1
        %s180 = scalar_lea.sflag [#allocation5], %s179
        %s181 = sand.u32 %s42, 1
        %s182 = smul.addr %s181, 256
        %s183 = scalar_lea.vmem [#allocation4], %s182
        // Predicated region
        $region33: #{tpu_custom_call.1} parent=31 // pred_check
          %p184 = pneg %p55
        $region34: #{tpu_custom_call.1} parent=31 // pred_check_branch
          %186 = sbr.rel (%p184) target = $region36
        $region35: #{tpu_custom_call.1} parent=31 // pred_region
          %187 = dma.done %s180, 4096
        $region36: #{tpu_custom_call.1} parent=31 // pred_fallthru
          _
        %s188 = sand.u32 %s42, 1
        %s189 = scalar_lea.sflag [#allocation5], %s188
        %s190 = sand.u32 %s42, 1
        %s191 = smul.addr %s190, 256
        %s192 = scalar_lea.vmem [#allocation4], %s191
        %p193 = pneg %p55
        %p194 = pneg %p52
        %p195 = pneg %p76
        %p196 = pneg %p73
        %p197 = pneg %p97
        %p198 = pneg %p94
        %p199 = pneg %p123
        %p200 = pneg %p120
        %s201 = sand.u32 %s110, 1
        %s202 = scalar_lea.sflag [#allocation6], %s201
        %s203 = sand.u32 %s110, 1
        %s204 = smul.addr %s203, 2
        %s205 = scalar_lea.vmem [#allocation7], %s204
        %s206 = smul.u32 32, %s25
        %p208 = scmp.eq.s32.totalorder %s25, 0
        // Predicated region
        $region37: #{tpu_custom_call.1} parent=31 // pred_check
          %p209 = pneg %p208
        $region38: #{tpu_custom_call.1} parent=31 // pred_check_branch
          %211 = sbr.rel (%p209) target = $region40
        $region39: #{tpu_custom_call.1} parent=31 // pred_region
          %v212 = vlaneseq
          %vm213 = vcmp.ge.s32.totalorder %v212, 0
          %vm214 = vcmp.lt.s32.totalorder %v212, 256
          %vm215 = vmand %vm213, %vm214
          %216 = vst.msk [vmem:[#allocation2] sm:$0x3] %vm215, 0.0
          %217 = vst.msk [vmem:[#allocation3] sm:$0x3] %vm215, -inf
        $region40: #{tpu_custom_call.1} parent=31 // pred_fallthru
          _
        %v218 = vld [vmem:[%s183] sm:$0xff]
        %v219 = vld [vmem:[%s183 + $0x8] sm:$0xff]
        %v220 = vld [vmem:[%s183 + $0x10] sm:$0xff]
        %v221 = vld [vmem:[%s183 + $0x18] sm:$0xff]
        %v222 = vld [vmem:[%s183 + $0x20] sm:$0xff]
        %v223 = vld [vmem:[%s183 + $0x28] sm:$0xff]
        %v224 = vld [vmem:[%s183 + $0x30] sm:$0xff]
        %v225 = vld [vmem:[%s183 + $0x38] sm:$0xff]
        %v226 = vld [vmem:[%s183 + $0x40] sm:$0xff]
        %v227 = vld [vmem:[%s183 + $0x48] sm:$0xff]
        %v228 = vld [vmem:[%s183 + $0x50] sm:$0xff]
        %v229 = vld [vmem:[%s183 + $0x58] sm:$0xff]
        %v230 = vld [vmem:[%s183 + $0x60] sm:$0xff]
        %v231 = vld [vmem:[%s183 + $0x68] sm:$0xff]
        %v232 = vld [vmem:[%s183 + $0x70] sm:$0xff]
        %v233 = vld [vmem:[%s183 + $0x78] sm:$0xff]
        %v234 = vld [vmem:[%s183 + $0x80] sm:$0xff]
        %v235 = vld [vmem:[%s183 + $0x88] sm:$0xff]
        %v236 = vld [vmem:[%s183 + $0x90] sm:$0xff]
        %v237 = vld [vmem:[%s183 + $0x98] sm:$0xff]
        %v238 = vld [vmem:[%s183 + $0xa0] sm:$0xff]
        %v239 = vld [vmem:[%s183 + $0xa8] sm:$0xff]
        %v240 = vld [vmem:[%s183 + $0xb0] sm:$0xff]
        %v241 = vld [vmem:[%s183 + $0xb8] sm:$0xff]
        %v242 = vld [vmem:[%s183 + $0xc0] sm:$0xff]
        %v243 = vld [vmem:[%s183 + $0xc8] sm:$0xff]
        %v244 = vld [vmem:[%s183 + $0xd0] sm:$0xff]
        %v245 = vld [vmem:[%s183 + $0xd8] sm:$0xff]
        %v246 = vld [vmem:[%s183 + $0xe0] sm:$0xff]
        %v247 = vld [vmem:[%s183 + $0xe8] sm:$0xff]
        %v248 = vld [vmem:[%s183 + $0xf0] sm:$0xff]
        %v249 = vld [vmem:[%s183 + $0xf8] sm:$0xff]
        %v250 = vunpack.c.l.bf16 %v218
        %v251 = vunpack.c.h.bf16 %v218
        %v252 = vunpack.c.l.bf16 %v219
        %v253 = vunpack.c.h.bf16 %v219
        %v254 = vunpack.c.l.bf16 %v220
        %v255 = vunpack.c.h.bf16 %v220
        %v256 = vunpack.c.l.bf16 %v221
        %v257 = vunpack.c.h.bf16 %v221
        %v258 = vunpack.c.l.bf16 %v222
        %v259 = vunpack.c.h.bf16 %v222
        %v260 = vunpack.c.l.bf16 %v223
        %v261 = vunpack.c.h.bf16 %v223
        %v262 = vunpack.c.l.bf16 %v224
        %v263 = vunpack.c.h.bf16 %v224
        %v264 = vunpack.c.l.bf16 %v225
        %v265 = vunpack.c.h.bf16 %v225
        %v266 = vunpack.c.l.bf16 %v226
        %v267 = vunpack.c.h.bf16 %v226
        %v268 = vunpack.c.l.bf16 %v227
        %v269 = vunpack.c.h.bf16 %v227
        %v270 = vunpack.c.l.bf16 %v228
        %v271 = vunpack.c.h.bf16 %v228
        %v272 = vunpack.c.l.bf16 %v229
        %v273 = vunpack.c.h.bf16 %v229
        %v274 = vunpack.c.l.bf16 %v230
        %v275 = vunpack.c.h.bf16 %v230
        %v276 = vunpack.c.l.bf16 %v231
        %v277 = vunpack.c.h.bf16 %v231
        %v278 = vunpack.c.l.bf16 %v232
        %v279 = vunpack.c.h.bf16 %v232
        %v280 = vunpack.c.l.bf16 %v233
        %v281 = vunpack.c.h.bf16 %v233
        %v282 = vunpack.c.l.bf16 %v234
        %v283 = vunpack.c.h.bf16 %v234
        %v284 = vunpack.c.l.bf16 %v235
        %v285 = vunpack.c.h.bf16 %v235
        %v286 = vunpack.c.l.bf16 %v236
        %v287 = vunpack.c.h.bf16 %v236
        %v288 = vunpack.c.l.bf16 %v237
        %v289 = vunpack.c.h.bf16 %v237
        %v290 = vunpack.c.l.bf16 %v238
        %v291 = vunpack.c.h.bf16 %v238
        %v292 = vunpack.c.l.bf16 %v239
        %v293 = vunpack.c.h.bf16 %v239
        %v294 = vunpack.c.l.bf16 %v240
        %v295 = vunpack.c.h.bf16 %v240
        %v296 = vunpack.c.l.bf16 %v241
        %v297 = vunpack.c.h.bf16 %v241
        %v298 = vunpack.c.l.bf16 %v242
        %v299 = vunpack.c.h.bf16 %v242
        %v300 = vunpack.c.l.bf16 %v243
        %v301 = vunpack.c.h.bf16 %v243
        %v302 = vunpack.c.l.bf16 %v244
        %v303 = vunpack.c.h.bf16 %v244
        %v304 = vunpack.c.l.bf16 %v245
        %v305 = vunpack.c.h.bf16 %v245
        %v306 = vunpack.c.l.bf16 %v246
        %v307 = vunpack.c.h.bf16 %v246
        %v308 = vunpack.c.l.bf16 %v247
        %v309 = vunpack.c.h.bf16 %v247
        %v310 = vunpack.c.l.bf16 %v248
        %v311 = vunpack.c.h.bf16 %v248
        %v312 = vunpack.c.l.bf16 %v249
        %v313 = vunpack.c.h.bf16 %v249
        %v314 = vld [vmem:[#allocation2] sm:$0x3]
        %v315 = vadd.f32 %v250, %v252
        %v316 = vadd.f32 %v315, %v254
        %v317 = vadd.f32 %v316, %v256
        %v318 = vadd.f32 %v317, %v258
        %v319 = vadd.f32 %v318, %v260
        %v320 = vadd.f32 %v319, %v262
        %v321 = vadd.f32 %v320, %v264
        %v322 = vadd.f32 %v321, %v266
        %v323 = vadd.f32 %v322, %v268
        %v324 = vadd.f32 %v323, %v270
        %v325 = vadd.f32 %v324, %v272
        %v326 = vadd.f32 %v325, %v274
        %v327 = vadd.f32 %v326, %v276
        %v328 = vadd.f32 %v327, %v278
        %v329 = vadd.f32 %v328, %v280
        %v330 = vadd.f32 %v329, %v282
        %v331 = vadd.f32 %v330, %v284
        %v332 = vadd.f32 %v331, %v286
        %v333 = vadd.f32 %v332, %v288
        %v334 = vadd.f32 %v333, %v290
        %v335 = vadd.f32 %v334, %v292
        %v336 = vadd.f32 %v335, %v294
        %v337 = vadd.f32 %v336, %v296
        %v338 = vadd.f32 %v337, %v298
        %v339 = vadd.f32 %v338, %v300
        %v340 = vadd.f32 %v339, %v302
        %v341 = vadd.f32 %v340, %v304
        %v342 = vadd.f32 %v341, %v306
        %v343 = vadd.f32 %v342, %v308
        %v344 = vadd.f32 %v343, %v310
        %v345 = vadd.f32 %v344, %v312
        %v346 = vrot.slane %v345, 4
        %v347 = vadd.f32 %v345, %v346
        %v348 = vrot.slane %v347, 2
        %v349 = vadd.f32 %v347, %v348
        %v350 = vrot.slane %v349, 1
        %v351 = vadd.f32 %v349, %v350
        %v352 = vadd.f32 %v251, %v253
        %v353 = vadd.f32 %v352, %v255
        %v354 = vadd.f32 %v353, %v257
        %v355 = vadd.f32 %v354, %v259
        %v356 = vadd.f32 %v355, %v261
        %v357 = vadd.f32 %v356, %v263
        %v358 = vadd.f32 %v357, %v265
        %v359 = vadd.f32 %v358, %v267
        %v360 = vadd.f32 %v359, %v269
        %v361 = vadd.f32 %v360, %v271
        %v362 = vadd.f32 %v361, %v273
        %v363 = vadd.f32 %v362, %v275
        %v364 = vadd.f32 %v363, %v277
        %v365 = vadd.f32 %v364, %v279
        %v366 = vadd.f32 %v365, %v281
        %v367 = vadd.f32 %v366, %v283
        %v368 = vadd.f32 %v367, %v285
        %v369 = vadd.f32 %v368, %v287
        %v370 = vadd.f32 %v369, %v289
        %v371 = vadd.f32 %v370, %v291
        %v372 = vadd.f32 %v371, %v293
        %v373 = vadd.f32 %v372, %v295
        %v374 = vadd.f32 %v373, %v297
        %v375 = vadd.f32 %v374, %v299
        %v376 = vadd.f32 %v375, %v301
        %v377 = vadd.f32 %v376, %v303
        %v378 = vadd.f32 %v377, %v305
        %v379 = vadd.f32 %v378, %v307
        %v380 = vadd.f32 %v379, %v309
        %v381 = vadd.f32 %v380, %v311
        %v382 = vadd.f32 %v381, %v313
        %v383 = vrot.slane %v382, 4
        %v384 = vadd.f32 %v382, %v383
        %v385 = vrot.slane %v384, 2
        %v386 = vadd.f32 %v384, %v385
        %v387 = vrot.slane %v386, 1
        %v388 = vadd.f32 %v386, %v387
        %v391 = vcombine.low %v351, %v388
        %v393 = vunpack.c.l.s4 1966171168
        %v394 = vunpack.c.0.s8 %v393
        %v395 = vlaneseq
        %v396 = vshrl.u32 %v395, 7
        %v397 = vsub.s32 %v394, %v396
        %v398 = vrot.slane %v391, %v397
        %v400 = vunpack.c.l.s4 1966171168
        %v401 = vunpack.c.0.s8 %v400
        %v402 = vlaneseq
        %v403 = vshrl.u32 %v402, 7
        %v404 = vsub.s32 %v401, %v403
        %v405 = vrot.slane %v398, %v404
        %v407 = vadd.f32 %v314, %v405
        %v408 = vlaneseq
        %vm409 = vcmp.ge.s32.totalorder %v408, 0
        %vm410 = vcmp.lt.s32.totalorder %v408, 256
        %vm411 = vmand %vm409, %vm410
        %412 = vst.msk [vmem:[#allocation2] sm:$0x3] %vm411, %v407
        %v413 = vld [vmem:[#allocation3] sm:$0x3]
        %v414 = vmax.f32 %v250, %v254
        %v415 = vmax.f32 %v252, %v256
        %v416 = vmax.f32 %v414, %v258
        %v417 = vmax.f32 %v415, %v260
        %v418 = vmax.f32 %v416, %v262
        %v419 = vmax.f32 %v417, %v264
        %v420 = vmax.f32 %v418, %v266
        %v421 = vmax.f32 %v419, %v268
        %v422 = vmax.f32 %v420, %v270
        %v423 = vmax.f32 %v421, %v272
        %v424 = vmax.f32 %v422, %v274
        %v425 = vmax.f32 %v423, %v276
        %v426 = vmax.f32 %v424, %v278
        %v427 = vmax.f32 %v425, %v280
        %v428 = vmax.f32 %v426, %v282
        %v429 = vmax.f32 %v427, %v284
        %v430 = vmax.f32 %v428, %v286
        %v431 = vmax.f32 %v429, %v288
        %v432 = vmax.f32 %v430, %v290
        %v433 = vmax.f32 %v431, %v292
        %v434 = vmax.f32 %v432, %v294
        %v435 = vmax.f32 %v433, %v296
        %v436 = vmax.f32 %v434, %v298
        %v437 = vmax.f32 %v435, %v300
        %v438 = vmax.f32 %v436, %v302
        %v439 = vmax.f32 %v437, %v304
        %v440 = vmax.f32 %v438, %v306
        %v441 = vmax.f32 %v439, %v308
        %v442 = vmax.f32 %v440, %v310
        %v443 = vmax.f32 %v441, %v312
        %v444 = vmax.f32 %v442, %v443
        %v445 = vrot.slane %v444, 4
        %v446 = vmax.f32 %v444, %v445
        %v447 = vrot.slane %v446, 2
        %v448 = vmax.f32 %v446, %v447
        %v449 = vrot.slane %v448, 1
        %v450 = vmax.f32 %v448, %v449
        %v451 = vmax.f32 %v251, %v255
        %v452 = vmax.f32 %v253, %v257
        %v453 = vmax.f32 %v451, %v259
        %v454 = vmax.f32 %v452, %v261
        %v455 = vmax.f32 %v453, %v263
        %v456 = vmax.f32 %v454, %v265
        %v457 = vmax.f32 %v455, %v267
        %v458 = vmax.f32 %v456, %v269
        %v459 = vmax.f32 %v457, %v271
        %v460 = vmax.f32 %v458, %v273
        %v461 = vmax.f32 %v459, %v275
        %v462 = vmax.f32 %v460, %v277
        %v463 = vmax.f32 %v461, %v279
        %v464 = vmax.f32 %v462, %v281
        %v465 = vmax.f32 %v463, %v283
        %v466 = vmax.f32 %v464, %v285
        %v467 = vmax.f32 %v465, %v287
        %v468 = vmax.f32 %v466, %v289
        %v469 = vmax.f32 %v467, %v291
        %v470 = vmax.f32 %v468, %v293
        %v471 = vmax.f32 %v469, %v295
        %v472 = vmax.f32 %v470, %v297
        %v473 = vmax.f32 %v471, %v299
        %v474 = vmax.f32 %v472, %v301
        %v475 = vmax.f32 %v473, %v303
        %v476 = vmax.f32 %v474, %v305
        %v477 = vmax.f32 %v475, %v307
        %v478 = vmax.f32 %v476, %v309
        %v479 = vmax.f32 %v477, %v311
        %v480 = vmax.f32 %v478, %v313
        %v481 = vmax.f32 %v479, %v480
        %v482 = vrot.slane %v481, 4
        %v483 = vmax.f32 %v481, %v482
        %v484 = vrot.slane %v483, 2
        %v485 = vmax.f32 %v483, %v484
        %v486 = vrot.slane %v485, 1
        %v487 = vmax.f32 %v485, %v486
        %v490 = vcombine.low %v450, %v487
        %v492 = vunpack.c.l.s4 1966171168
        %v493 = vunpack.c.0.s8 %v492
        %v494 = vlaneseq
        %v495 = vshrl.u32 %v494, 7
        %v496 = vsub.s32 %v493, %v495
        %v497 = vrot.slane %v490, %v496
        %v499 = vunpack.c.l.s4 1966171168
        %v500 = vunpack.c.0.s8 %v499
        %v501 = vlaneseq
        %v502 = vshrl.u32 %v501, 7
        %v503 = vsub.s32 %v500, %v502
        %v504 = vrot.slane %v497, %v503
        %v506 = vmax.f32 %v413, %v504
        %507 = vst.msk [vmem:[#allocation3] sm:$0x3] %vm411, %v506
        // Predicated region
        $region41: #{tpu_custom_call.1} parent=31 // pred_check
          %p508 = pneg %p208
        $region42: #{tpu_custom_call.1} parent=31 // pred_check_branch
          %510 = sbr.rel (%p508) target = $region44
        $region43: #{tpu_custom_call.1} parent=31 // pred_region
          %v511 = vld [vmem:[#allocation2] sm:$0x3]
          %v512 = vmul.f32 %v511, 0.00390625
          %v514 = vlaneseq
          %v515 = vshrl.u32 %v514, 7
          %v516 = vsub.s32 0, %v515
          %v517 = vrot.slane %v512, %v516
          %v518 = vlaneseq
          %v519 = vshrl.u32 %v518, 7
          %v520 = vsub.s32 1, %v519
          %v521 = vrot.slane %v512, %v520
          %v524 = vpack.c.bf16 %v517, %v517
          %v525 = vpack.c.bf16 %v521, %v521
          %v526 = vld [vmem:[#allocation3] sm:$0x3]
          %v528 = vlaneseq
          %v529 = vshrl.u32 %v528, 7
          %v530 = vsub.s32 0, %v529
          %v531 = vrot.slane %v526, %v530
          %v532 = vlaneseq
          %v533 = vshrl.u32 %v532, 7
          %v534 = vsub.s32 1, %v533
          %v535 = vrot.slane %v526, %v534
          %v538 = vpack.c.bf16 %v531, %v531
          %v539 = vpack.c.bf16 %v535, %v535
          %v540 = vld [vmem:[%s1] sm:$0xf]
          %v541 = vld [vmem:[%s1 + $0x4] sm:$0xf]
          %v542 = vld [vmem:[%s1 + $0x8] sm:$0xf]
          %v543 = vld [vmem:[%s1 + $0xc] sm:$0xf]
          %v544 = vld [vmem:[%s1 + $0x10] sm:$0xf]
          %v545 = vld [vmem:[%s1 + $0x14] sm:$0xf]
          %v546 = vld [vmem:[%s1 + $0x18] sm:$0xf]
          %v547 = vld [vmem:[%s1 + $0x1c] sm:$0xf]
          %v548 = vld [vmem:[%s1 + $0x20] sm:$0xf]
          %v549 = vld [vmem:[%s1 + $0x24] sm:$0xf]
          %v550 = vld [vmem:[%s1 + $0x28] sm:$0xf]
          %v551 = vld [vmem:[%s1 + $0x2c] sm:$0xf]
          %v552 = vld [vmem:[%s1 + $0x30] sm:$0xf]
          %v553 = vld [vmem:[%s1 + $0x34] sm:$0xf]
          %v554 = vld [vmem:[%s1 + $0x38] sm:$0xf]
          %v555 = vld [vmem:[%s1 + $0x3c] sm:$0xf]
          %v556 = vld [vmem:[%s1 + $0x40] sm:$0xf]
          %v557 = vld [vmem:[%s1 + $0x44] sm:$0xf]
          %v558 = vld [vmem:[%s1 + $0x48] sm:$0xf]
          %v559 = vld [vmem:[%s1 + $0x4c] sm:$0xf]
          %v560 = vld [vmem:[%s1 + $0x50] sm:$0xf]
          %v561 = vld [vmem:[%s1 + $0x54] sm:$0xf]
          %v562 = vld [vmem:[%s1 + $0x58] sm:$0xf]
          %v563 = vld [vmem:[%s1 + $0x5c] sm:$0xf]
          %v564 = vld [vmem:[%s1 + $0x60] sm:$0xf]
          %v565 = vld [vmem:[%s1 + $0x64] sm:$0xf]
          %v566 = vld [vmem:[%s1 + $0x68] sm:$0xf]
          %v567 = vld [vmem:[%s1 + $0x6c] sm:$0xf]
          %v568 = vld [vmem:[%s1 + $0x70] sm:$0xf]
          %v569 = vld [vmem:[%s1 + $0x74] sm:$0xf]
          %v570 = vld [vmem:[%s1 + $0x78] sm:$0xf]
          %v571 = vld [vmem:[%s1 + $0x7c] sm:$0xf]
          %v604 = vunpack.c.l.b16 %v540
          %v605 = vunpack.c.l.b16 %v541
          %v606 = vunpack.c.l.b16 %v542
          %v607 = vunpack.c.l.b16 %v543
          %v608 = vunpack.c.l.b16 %v544
          %v609 = vunpack.c.l.b16 %v545
          %v610 = vunpack.c.l.b16 %v546
          %v611 = vunpack.c.l.b16 %v547
          %v612 = vunpack.c.l.b16 %v548
          %v613 = vunpack.c.l.b16 %v549
          %v614 = vunpack.c.l.b16 %v550
          %v615 = vunpack.c.l.b16 %v551
          %v616 = vunpack.c.l.b16 %v552
          %v617 = vunpack.c.l.b16 %v553
          %v618 = vunpack.c.l.b16 %v554
          %v619 = vunpack.c.l.b16 %v555
          %v620 = vunpack.c.l.b16 %v556
          %v621 = vunpack.c.l.b16 %v557
          %v622 = vunpack.c.l.b16 %v558
          %v623 = vunpack.c.l.b16 %v559
          %v624 = vunpack.c.l.b16 %v560
          %v625 = vunpack.c.l.b16 %v561
          %v626 = vunpack.c.l.b16 %v562
          %v627 = vunpack.c.l.b16 %v563
          %v628 = vunpack.c.l.b16 %v564
          %v629 = vunpack.c.l.b16 %v565
          %v630 = vunpack.c.l.b16 %v566
          %v631 = vunpack.c.l.b16 %v567
          %v632 = vunpack.c.l.b16 %v568
          %v633 = vunpack.c.l.b16 %v569
          %v634 = vunpack.c.l.b16 %v570
          %v635 = vunpack.c.l.b16 %v571
          %v636 = vpack.c.b16 %v605, %v604
          %v637 = vpack.c.b16 %v607, %v606
          %v638 = vpack.c.b16 %v609, %v608
          %v639 = vpack.c.b16 %v611, %v610
          %v640 = vpack.c.b16 %v613, %v612
          %v641 = vpack.c.b16 %v615, %v614
          %v642 = vpack.c.b16 %v617, %v616
          %v643 = vpack.c.b16 %v619, %v618
          %v644 = vpack.c.b16 %v621, %v620
          %v645 = vpack.c.b16 %v623, %v622
          %v646 = vpack.c.b16 %v625, %v624
          %v647 = vpack.c.b16 %v627, %v626
          %v648 = vpack.c.b16 %v629, %v628
          %v649 = vpack.c.b16 %v631, %v630
          %v650 = vpack.c.b16 %v633, %v632
          %v651 = vpack.c.b16 %v635, %v634
          %668 = vmatprep.subr.bf16.mxu0 0
          %669 = vmatpush1.bf16.msra.mxu0 %v643
          %670 = vmatprep.subr.bf16.mxu0 0
          %671 = vmatpush1.bf16.msra.mxu0 %v642
          %672 = vmatprep.subr.bf16.mxu0 0
          %673 = vmatpush1.bf16.msra.mxu0 %v641
          %674 = vmatprep.subr.bf16.mxu0 0
          %675 = vmatpush1.bf16.msra.mxu0 %v640
          %676 = vmatprep.subr.bf16.mxu0 0
          %677 = vmatpush1.bf16.msra.mxu0 %v639
          %678 = vmatprep.subr.bf16.mxu0 0
          %679 = vmatpush1.bf16.msra.mxu0 %v638
          %680 = vmatprep.subr.bf16.mxu0 0
          %681 = vmatpush1.bf16.msra.mxu0 %v637
          %682 = vmatprep.subr.bf16.mxu0 0
          %683 = vmatpush1.bf16.msra.mxu0 %v636
          %684 = vmatprep.subr.bf16.mxu0 0
          %685 = vmatpush2.bf16.msra.mxu0 %v651
          %686 = vmatprep.subr.bf16.mxu0 0
          %687 = vmatpush2.bf16.msra.mxu0 %v650
          %688 = vmatprep.subr.bf16.mxu0 0
          %689 = vmatpush2.bf16.msra.mxu0 %v649
          %690 = vmatprep.subr.bf16.mxu0 0
          %691 = vmatpush2.bf16.msra.mxu0 %v648
          %692 = vmatprep.subr.bf16.mxu0 0
          %693 = vmatpush2.bf16.msra.mxu0 %v647
          %694 = vmatprep.subr.bf16.mxu0 0
          %695 = vmatpush2.bf16.msra.mxu0 %v646
          %696 = vmatprep.subr.bf16.mxu0 0
          %697 = vmatpush2.bf16.msra.mxu0 %v645
          %698 = vmatprep.subr.bf16.mxu0 0
          %699 = vmatpush2.bf16.msra.mxu0 %v644
          %700 = vmatprep.mubr.bf16.mxu0 %v525
          %701 = vmatmul.mubr.bf16.gmra.mxu0 %v524
          %v702 = vpop.f32.mrf.mxu0
          %v703 = vadd.f32 0.0, %v702
          %v704 = vpop.f32.mrf.mxu0
          %v705 = vpop.f32.mrf.mxu0
          %v706 = vpop.f32.mrf.mxu0
          %707 = vdwg.mxu0
          %v708 = vmax.f32 %v703, 0.0
          %709 = vmatprep.subr.bf16.mxu0 0
          %710 = vmatpush1.bf16.msra.mxu0 %v643
          %711 = vmatprep.subr.bf16.mxu0 0
          %712 = vmatpush1.bf16.msra.mxu0 %v642
          %713 = vmatprep.subr.bf16.mxu0 0
          %714 = vmatpush1.bf16.msra.mxu0 %v641
          %715 = vmatprep.subr.bf16.mxu0 0
          %716 = vmatpush1.bf16.msra.mxu0 %v640
          %717 = vmatprep.subr.bf16.mxu0 0
          %718 = vmatpush1.bf16.msra.mxu0 %v639
          %719 = vmatprep.subr.bf16.mxu0 0
          %720 = vmatpush1.bf16.msra.mxu0 %v638
          %721 = vmatprep.subr.bf16.mxu0 0
          %722 = vmatpush1.bf16.msra.mxu0 %v637
          %723 = vmatprep.subr.bf16.mxu0 0
          %724 = vmatpush1.bf16.msra.mxu0 %v636
          %725 = vmatprep.subr.bf16.mxu0 0
          %726 = vmatpush2.bf16.msra.mxu0 %v651
          %727 = vmatprep.subr.bf16.mxu0 0
          %728 = vmatpush2.bf16.msra.mxu0 %v650
          %729 = vmatprep.subr.bf16.mxu0 0
          %730 = vmatpush2.bf16.msra.mxu0 %v649
          %731 = vmatprep.subr.bf16.mxu0 0
          %732 = vmatpush2.bf16.msra.mxu0 %v648
          %733 = vmatprep.subr.bf16.mxu0 0
          %734 = vmatpush2.bf16.msra.mxu0 %v647
          %735 = vmatprep.subr.bf16.mxu0 0
          %736 = vmatpush2.bf16.msra.mxu0 %v646
          %737 = vmatprep.subr.bf16.mxu0 0
          %738 = vmatpush2.bf16.msra.mxu0 %v645
          %739 = vmatprep.subr.bf16.mxu0 0
          %740 = vmatpush2.bf16.msra.mxu0 %v644
          %741 = vmatprep.mubr.bf16.mxu0 %v539
          %742 = vmatmul.mubr.bf16.gmra.mxu0 %v538
          %v743 = vpop.f32.mrf.mxu0
          %v744 = vadd.f32 0.0, %v743
          %v745 = vpop.f32.mrf.mxu0
          %v746 = vpop.f32.mrf.mxu0
          %v747 = vpop.f32.mrf.mxu0
          %748 = vdwg.mxu0
          %v749 = vmax.f32 %v744, 0.0
          %v750 = vadd.f32 %v708, %v749
          %v751 = vpack.c.bf16 %v750, %v750
          %v752 = vld [vmem:[%s2] sm:$0xff]
          %v753 = vld [vmem:[%s2 + $0x8] sm:$0xff]
          %v756 = vunpack.c.l.b16 %v752
          %v757 = vunpack.c.h.b16 %v752
          %v758 = vunpack.c.l.b16 %v753
          %v759 = vunpack.c.h.b16 %v753
          %v760 = vpack.c.b16 %v758, %v756
          %v761 = vpack.c.b16 %v759, %v757
          %vm764 = vcmask 130048
          %v766 = vsel %vm764, %v751, 0
          %768 = vmatprep.subr.bf16.mxu0 0
          %769 = vmatpush1.bf16.msra.mxu0 0
          %770 = vmatprep.subr.bf16.mxu0 0
          %771 = vmatpush1.bf16.msra.mxu0 0
          %772 = vmatprep.subr.bf16.mxu0 0
          %773 = vmatpush1.bf16.msra.mxu0 0
          %774 = vmatprep.subr.bf16.mxu0 0
          %775 = vmatpush1.bf16.msra.mxu0 0
          %776 = vmatprep.subr.bf16.mxu0 0
          %777 = vmatpush1.bf16.msra.mxu0 0
          %778 = vmatprep.subr.bf16.mxu0 0
          %779 = vmatpush1.bf16.msra.mxu0 0
          %780 = vmatprep.subr.bf16.mxu0 0
          %781 = vmatpush1.bf16.msra.mxu0 0
          %782 = vmatprep.subr.bf16.mxu0 %v761
          %783 = vmatpush1.bf16.msra.mxu0 %v760
          %784 = vmatprep.subr.bf16.mxu0 0
          %785 = vmatpush2.bf16.msra.mxu0 0
          %786 = vmatprep.subr.bf16.mxu0 0
          %787 = vmatpush2.bf16.msra.mxu0 0
          %788 = vmatprep.subr.bf16.mxu0 0
          %789 = vmatpush2.bf16.msra.mxu0 0
          %790 = vmatprep.subr.bf16.mxu0 0
          %791 = vmatpush2.bf16.msra.mxu0 0
          %792 = vmatprep.subr.bf16.mxu0 0
          %793 = vmatpush2.bf16.msra.mxu0 0
          %794 = vmatprep.subr.bf16.mxu0 0
          %795 = vmatpush2.bf16.msra.mxu0 0
          %796 = vmatprep.subr.bf16.mxu0 0
          %797 = vmatpush2.bf16.msra.mxu0 0
          %798 = vmatprep.subr.bf16.mxu0 0
          %799 = vmatpush2.bf16.msra.mxu0 0
          %800 = vmatprep.mubr.bf16.mxu0 0
          %801 = vmatmul.mubr.bf16.gmra.mxu0 %v766
          %v802 = vpop.f32.mrf.mxu0
          %v803 = vadd.f32 0.0, %v802
          %v804 = vpop.f32.mrf.mxu0
          %v805 = vadd.f32 0.0, %v804
          %v806 = vpop.f32.mrf.mxu0
          %v807 = vpop.f32.mrf.mxu0
          %808 = vdwg.mxu0
          %v809 = vxor.u32 %v803, 2147483648
          %v810 = vxor.u32 %v805, 2147483648
          %v811 = vmul.f32 %v809, 1.442695
          %v812 = vpow.pop %v811
          %v813 = vmul.f32 %v810, 1.442695
          %v814 = vpow.pop %v813
          %v815 = vadd.f32 %v812, 1.0
          %v816 = vadd.f32 %v814, 1.0
          %v817 = vrcp.pop %v815
          %v818 = vmul.f32 1.0, %v817
          %v819 = vrcp.pop %v816
          %v820 = vmul.f32 1.0, %v819
          %v823 = vcombine.low %v818, %v820
          %v825 = vunpack.c.l.s4 1966171168
          %v826 = vunpack.c.0.s8 %v825
          %v827 = vlaneseq
          %v828 = vshrl.u32 %v827, 7
          %v829 = vsub.s32 %v826, %v828
          %v830 = vrot.slane %v823, %v829
          %v832 = vunpack.c.l.s4 1966171168
          %v833 = vunpack.c.0.s8 %v832
          %v834 = vlaneseq
          %v835 = vshrl.u32 %v834, 7
          %v836 = vsub.s32 %v833, %v835
          %v837 = vrot.slane %v830, %v836
          %839 = vst.msk [vmem:[%s205] sm:$0x3] %vm411, %v837
        $region44: #{tpu_custom_call.1} parent=31 // pred_fallthru
          _
        %s840 = sand.u32 %s110, 1
        %s841 = scalar_lea.sflag [#allocation6], %s840
        %s842 = sand.u32 %s110, 1
        %s843 = smul.addr %s842, 2
        %s844 = scalar_lea.vmem [#allocation7], %s843
        // Predicated region
        $region45: #{tpu_custom_call.1} parent=31 // pred_check
          %p845 = pneg %p120
        $region46: #{tpu_custom_call.1} parent=31 // pred_check_branch
          %847 = sbr.rel (%p845) target = $region48
        $region47: #{tpu_custom_call.1} parent=31 // pred_region
          %s849 = ssub.s32 32, 32
          %850 = vsyncadd %s841, %s849
          %s851 = smul.addr %s24, 2
          %s852 = smul.addr %s851, 16
          %s853 = scalar_lea.hbm %s3, %s852
          %s855 = sshll.u32 %s844, 4
          %s856 = int_to_ptr.vmem [resolvable:$true] %s855
          %858 = dma.vmem_to_hbm [thread:$0]  %s856, 32, %s853, %s841
        $region48: #{tpu_custom_call.1} parent=31 // pred_fallthru
          _
      $region32: #{tpu_custom_call.1} parent=5 // pred_fallthru
        _
      %p859 = scmp.le.s32.totalorder 2, %s15
      // Predicated region
      $region49: #{tpu_custom_call.1} parent=5 // pred_check
        %p860 = pneg %p859
      $region50: #{tpu_custom_call.1} parent=5 // pred_check_branch
        %862 = sbr.rel (%p860) target = $region52
      $region51: #{tpu_custom_call.1} parent=5 // pred_region
        %s863 = ssub.s32 %s15, 2
        // Predicated region
        $region53: #{tpu_custom_call.1} parent=51 // pred_check
          %p864 = pneg %p126
        $region54: #{tpu_custom_call.1} parent=51 // pred_check_branch
          %866 = sbr.rel (%p864) target = $region56
        $region55: #{tpu_custom_call.1} parent=51 // pred_region
          %s867 = sand.u32 %s111, 1
          %s868 = scalar_lea.sflag [#allocation6], %s867
          %s869 = sand.u32 %s111, 1
          %s870 = smul.addr %s869, 2
          %s871 = scalar_lea.vmem [#allocation7], %s870
          %872 = dma.done %s868, 32
        $region56: #{tpu_custom_call.1} parent=51 // pred_fallthru
          _
      $region52: #{tpu_custom_call.1} parent=5 // pred_fallthru
        _
    $region6: #{tpu_custom_call.1} parent=1 // loop_footer
      %s19 = sadd.s32 1, %s15
    $region7: #{tpu_custom_call.1} parent=1 // loop_footer_branch
      %14 = sbr.rel target = $region3
    $region8: #{tpu_custom_call.1} parent=1 // loop_exit
      _
    %873 = vsyncpa [#allocation5], 1
    %s874 = scalar_lea.sflag [#allocation5], 1
    %875 = vsyncpa %s874, 1
    %876 = vsyncpa [#allocation6], 1
    %s877 = scalar_lea.sflag [#allocation6], 1
    %878 = vsyncpa %s877, 1

</llo_original>
